<compile_context>
chip_gen: v7x
topology: tpu7x:2x2x1
jax: 0.10.0
libtpu: 0.0.40
codegen_flags: <defaults>
</compile_context>

<pallas_src>
import functools

import jax
import jax.numpy as jnp
from jax.experimental import pallas as pl
from jax.experimental.pallas import tpu as pltpu


def _sigmoid(x):
    # logistic(x) == 0.5*tanh(0.5*x) + 0.5 : one EUP push + cheap VPU ops.
    return 0.5 * jnp.tanh(0.5 * x) + 0.5


def _round_up(x, m):
    return ((x + m - 1) // m) * m


def _make_dice_kernel(num_preds):
    """Kernel computing per-example partial sums for `num_preds` predictions."""
    P = num_preds

    def kernel(*refs):
        # refs = (pred_0..pred_{P-1}, target,
        #         inter_0..inter_{P-1}, psum_0..psum_{P-1}, tsum)
        pred_refs = refs[:P]
        target_ref = refs[P]
        inter_refs = refs[P + 1:2 * P + 1]
        psum_refs = refs[2 * P + 1:3 * P + 1]
        tsum_ref = refs[3 * P + 1]

        r = pl.program_id(1)  # reduction axis over feature-row tiles

        @pl.when(r == 0)
        def _init():
            for ref in refs[P + 1:]:
                ref[...] = jnp.zeros_like(ref)

        rt = target_ref.shape[1]  # rows of 128 lanes in this tile (multiple of 8)

        tsum = tsum_ref[...]                       # (1, N, 8, 128)
        inters = [ref[...] for ref in inter_refs]  # each (1, N, 8, 128)
        psums = [ref[...] for ref in psum_refs]

        # Lane-dense accumulation: fold the rt/8 aligned (8,128) sub-blocks
        # into the resident accumulators with pure VPU adds.  The cross-lane
        # (XLU) reduction is deferred to plain JAX outside the kernel.
        for s in range(rt // 8):
            lo = s * 8
            t_s = target_ref[:, lo:lo + 8, :].astype(jnp.float32)   # (N, 8, 128)
            tsum = tsum + t_s[jnp.newaxis]
            for i in range(P):
                p_s = _sigmoid(
                    pred_refs[i][:, lo:lo + 8, :].astype(jnp.float32))
                inters[i] = inters[i] + (p_s * t_s)[jnp.newaxis]
                psums[i] = psums[i] + p_s[jnp.newaxis]

        tsum_ref[...] = tsum
        for i in range(P):
            inter_refs[i][...] = inters[i]
            psum_refs[i][...] = psums[i]

    return kernel


def _dice_sums(pred_list, target):
    """Fused per-example sums for all predictions against one target.

    pred_list: list of (N, ...) arrays (same flattened size as target).
    Returns (inter, psum) of shape (P, N) and tsum of shape (N,), all f32.
    """
    P = len(pred_list)
    N = target.shape[0]
    F = 1
    for d in target.shape[1:]:
        F *= d

    # ---- tiling over the flattened feature axis ---------------------------
    R0 = pl.cdiv(F, 128)                       # 128-lane rows before padding
    row_bytes = (P + 1) * N * 128 * 4          # bytes per sublane-row of blocks
    budget = 4 * 1024 * 1024                   # conservative (v5e scoped 16MiB,
                                               #  v7x physical 64MiB), x2 buffers
    rt = max(8, min(256, (budget // row_bytes) // 8 * 8, _round_up(R0, 8)))
    num_tiles = pl.cdiv(R0, rt)
    n_par = 2 if num_tiles >= 2 else 1         # leading 'parallel' axis (v7x)
    num_tiles = _round_up(num_tiles, n_par)
    n_red = num_tiles // n_par
    R = num_tiles * rt
    Fp = R * 128

    def prep(x, pad_value):
        xf = x.reshape(N, F)
        if Fp != F:
            xf = jnp.pad(xf, ((0, 0), (0, Fp - F)), constant_values=pad_value)
        return xf.reshape(N, R, 128)

    # Pad preds with a large negative (sigmoid -> 0) and target with 0 so the
    # padding contributes nothing to intersection or union.
    preds = [prep(p, -1e9) for p in pred_list]
    tgt = prep(target, 0)

    in_spec = pl.BlockSpec((N, rt, 128), lambda c, r: (0, c * n_red + r, 0))
    acc_spec = pl.BlockSpec((1, N, 8, 128), lambda c, r: (c, 0, 0, 0))
    acc_shape = jax.ShapeDtypeStruct((n_par, N, 8, 128), jnp.float32)

    outs = pl.pallas_call(
        _make_dice_kernel(P),
        out_shape=tuple([acc_shape] * (2 * P + 1)),
        grid_spec=pltpu.PrefetchScalarGridSpec(
            num_scalar_prefetch=0,
            grid=(n_par, n_red),
            in_specs=[in_spec] * (P + 1),
            out_specs=[acc_spec] * (2 * P + 1),
        ),
        compiler_params=pltpu.CompilerParams(
            dimension_semantics=("parallel", "arbitrary"),
        ),
    )(*preds, tgt)

    # Tiny final reductions (cross-lane / cross-sublane) in plain XLA.
    inter = jnp.stack([o.sum(axis=(0, 2, 3)) for o in outs[:P]])        # (P, N)
    psum = jnp.stack([o.sum(axis=(0, 2, 3)) for o in outs[P:2 * P]])    # (P, N)
    tsum = outs[2 * P].sum(axis=(0, 2, 3))                              # (N,)
    return inter, psum, tsum


@functools.partial(jax.jit, static_argnames=("smooth",))
def dice_loss_forward(pred, aux_outputs, target, smooth=1.0):
    """DiceLoss.forward: main loss + 0.4 * sum of aux losses (aux may be None)."""
    preds = [pred]
    if aux_outputs is not None:
        preds.extend(aux_outputs)

    inter, psum, tsum = _dice_sums(preds, target)
    union = psum + tsum[jnp.newaxis, :]
    losses = (1.0 - (2.0 * inter + smooth) / (union + smooth)).mean(axis=1)  # (P,)

    main = losses[0]
    if len(preds) == 1:
        return main
    return main + 0.4 * jnp.sum(losses[1:])


def _reference(pred, aux_outputs, target, smooth=1.0):
    """Pure-JAX reference mirroring the PyTorch module."""
    def dl(p, t):
        n = p.shape[0]
        pf = jax.nn.sigmoid(p.astype(jnp.float32)).reshape(n, -1)
        tf = t.reshape(n, -1).astype(jnp.float32)
        inter = (pf * tf).sum(1)
        union = pf.sum(1) + tf.sum(1)
        return (1.0 - (2.0 * inter + smooth) / (union + smooth)).mean()

    main = dl(pred, target)
    if aux_outputs is None or len(aux_outputs) == 0:
        return main
    return main + 0.4 * sum(dl(a, target) for a in aux_outputs)


if __name__ == "__main__":
    key = jax.random.PRNGKey(0)
    k1, k2, k3, k4, k5, k6, k7 = jax.random.split(key, 7)

    # Primary small case (NCHW), main + 2 auxiliary outputs fused in one call.
    shape = (2, 4, 16, 16)
    pred = jax.random.normal(k1, shape, dtype=jnp.float32)
    aux0 = jax.random.normal(k2, shape, dtype=jnp.float32)
    aux1 = jax.random.normal(k3, shape, dtype=jnp.float32)
    target = (jax.random.uniform(k4, shape) > 0.5).astype(jnp.float32)

    loss_aux = jax.block_until_ready(dice_loss_forward(pred, (aux0, aux1), target))
    ref_aux = _reference(pred, (aux0, aux1), target)
    assert jnp.allclose(loss_aux, ref_aux, rtol=1e-5, atol=1e-5), (loss_aux, ref_aux)

    loss_main = jax.block_until_ready(dice_loss_forward(pred, None, target))
    ref_main = _reference(pred, None, target)
    assert jnp.allclose(loss_main, ref_main, rtol=1e-5, atol=1e-5), (loss_main, ref_main)

    # Larger case: exercises feature padding, multi-step reduction and the
    # 2-way 'parallel' leading grid axis.
    shape2 = (2, 4, 160, 160)
    pred2 = jax.random.normal(k5, shape2, dtype=jnp.float32)
    aux2 = jax.random.normal(k6, shape2, dtype=jnp.float32)
    target2 = (jax.random.uniform(k7, shape2) > 0.5).astype(jnp.float32)
    loss2 = jax.block_until_ready(dice_loss_forward(pred2, (aux2,), target2))
    ref2 = _reference(pred2, (aux2,), target2)
    assert jnp.allclose(loss2, ref2, rtol=1e-5, atol=1e-5), (loss2, ref2)

    print("KERNEL_OK")
</pallas_src>

<mosaic_0001>
module attributes {stable_mosaic.version = 11 : i64} {
  func.func @kernel(%arg0: i32, %arg1: i32, %arg2: memref<2x8x128xf32, #tpu.memory_space<vmem>>, %arg3: memref<2x8x128xf32, #tpu.memory_space<vmem>>, %arg4: memref<2x8x128xf32, #tpu.memory_space<vmem>>, %arg5: memref<2x8x128xf32, #tpu.memory_space<vmem>>, %arg6: memref<1x2x8x128xf32, #tpu.memory_space<vmem>>, %arg7: memref<1x2x8x128xf32, #tpu.memory_space<vmem>>, %arg8: memref<1x2x8x128xf32, #tpu.memory_space<vmem>>, %arg9: memref<1x2x8x128xf32, #tpu.memory_space<vmem>>, %arg10: memref<1x2x8x128xf32, #tpu.memory_space<vmem>>, %arg11: memref<1x2x8x128xf32, #tpu.memory_space<vmem>>, %arg12: memref<1x2x8x128xf32, #tpu.memory_space<vmem>>) attributes {dimension_semantics = [#tpu.dimension_semantics<parallel>, #tpu.dimension_semantics<arbitrary>], iteration_bounds = array<i64: 1, 1>, scalar_prefetch = 0 : i64, scratch_operands = 0 : i64, tpu.core_type = #tpu.core_type<tc>, window_params = [{transform_indices = @transform_0, window_bounds = array<i64: 2, 8, 128>}, {transform_indices = @transform_1, window_bounds = array<i64: 2, 8, 128>}, {transform_indices = @transform_2, window_bounds = array<i64: 2, 8, 128>}, {transform_indices = @transform_3, window_bounds = array<i64: 2, 8, 128>}, {transform_indices = @transform_4, window_bounds = array<i64: 1, 2, 8, 128>}, {transform_indices = @transform_5, window_bounds = array<i64: 1, 2, 8, 128>}, {transform_indices = @transform_6, window_bounds = array<i64: 1, 2, 8, 128>}, {transform_indices = @transform_7, window_bounds = array<i64: 1, 2, 8, 128>}, {transform_indices = @transform_8, window_bounds = array<i64: 1, 2, 8, 128>}, {transform_indices = @transform_9, window_bounds = array<i64: 1, 2, 8, 128>}, {transform_indices = @transform_10, window_bounds = array<i64: 1, 2, 8, 128>}]} {
    %c0_i32 = arith.constant 0 : i32
    %0 = arith.cmpi eq, %arg1, %c0_i32 : i32
    %1 = arith.extui %0 : i1 to i32
    %c0_i32_0 = arith.constant 0 : i32
    %2 = arith.cmpi ne, %1, %c0_i32_0 : i32
    scf.if %2 {
      %cst_76 = arith.constant 0.000000e+00 : f32
      %59 = vector.broadcast %cst_76 : f32 to vector<1x2x8x128xf32>
      %c0_77 = arith.constant 0 : index
      %c0_78 = arith.constant 0 : index
      %c0_79 = arith.constant 0 : index
      %c0_80 = arith.constant 0 : index
      %60 = vector.load %arg6[%c0_77, %c0_78, %c0_79, %c0_80] : memref<1x2x8x128xf32, #tpu.memory_space<vmem>>, vector<1x2x8x128xf32>
      tpu.vector_store %arg6[%c0_77, %c0_78, %c0_79, %c0_80], %59 {strides = array<i32>} : memref<1x2x8x128xf32, #tpu.memory_space<vmem>>, vector<1x2x8x128xf32>,
      %cst_81 = arith.constant 0.000000e+00 : f32
      %61 = vector.broadcast %cst_81 : f32 to vector<1x2x8x128xf32>
      %c0_82 = arith.constant 0 : index
      %c0_83 = arith.constant 0 : index
      %c0_84 = arith.constant 0 : index
      %c0_85 = arith.constant 0 : index
      %62 = vector.load %arg7[%c0_82, %c0_83, %c0_84, %c0_85] : memref<1x2x8x128xf32, #tpu.memory_space<vmem>>, vector<1x2x8x128xf32>
      tpu.vector_store %arg7[%c0_82, %c0_83, %c0_84, %c0_85], %61 {strides = array<i32>} : memref<1x2x8x128xf32, #tpu.memory_space<vmem>>, vector<1x2x8x128xf32>,
      %cst_86 = arith.constant 0.000000e+00 : f32
      %63 = vector.broadcast %cst_86 : f32 to vector<1x2x8x128xf32>
      %c0_87 = arith.constant 0 : index
      %c0_88 = arith.constant 0 : index
      %c0_89 = arith.constant 0 : index
      %c0_90 = arith.constant 0 : index
      %64 = vector.load %arg8[%c0_87, %c0_88, %c0_89, %c0_90] : memref<1x2x8x128xf32, #tpu.memory_space<vmem>>, vector<1x2x8x128xf32>
      tpu.vector_store %arg8[%c0_87, %c0_88, %c0_89, %c0_90], %63 {strides = array<i32>} : memref<1x2x8x128xf32, #tpu.memory_space<vmem>>, vector<1x2x8x128xf32>,
      %cst_91 = arith.constant 0.000000e+00 : f32
      %65 = vector.broadcast %cst_91 : f32 to vector<1x2x8x128xf32>
      %c0_92 = arith.constant 0 : index
      %c0_93 = arith.constant 0 : index
      %c0_94 = arith.constant 0 : index
      %c0_95 = arith.constant 0 : index
      %66 = vector.load %arg9[%c0_92, %c0_93, %c0_94, %c0_95] : memref<1x2x8x128xf32, #tpu.memory_space<vmem>>, vector<1x2x8x128xf32>
      tpu.vector_store %arg9[%c0_92, %c0_93, %c0_94, %c0_95], %65 {strides = array<i32>} : memref<1x2x8x128xf32, #tpu.memory_space<vmem>>, vector<1x2x8x128xf32>,
      %cst_96 = arith.constant 0.000000e+00 : f32
      %67 = vector.broadcast %cst_96 : f32 to vector<1x2x8x128xf32>
      %c0_97 = arith.constant 0 : index
      %c0_98 = arith.constant 0 : index
      %c0_99 = arith.constant 0 : index
      %c0_100 = arith.constant 0 : index
      %68 = vector.load %arg10[%c0_97, %c0_98, %c0_99, %c0_100] : memref<1x2x8x128xf32, #tpu.memory_space<vmem>>, vector<1x2x8x128xf32>
      tpu.vector_store %arg10[%c0_97, %c0_98, %c0_99, %c0_100], %67 {strides = array<i32>} : memref<1x2x8x128xf32, #tpu.memory_space<vmem>>, vector<1x2x8x128xf32>,
      %cst_101 = arith.constant 0.000000e+00 : f32
      %69 = vector.broadcast %cst_101 : f32 to vector<1x2x8x128xf32>
      %c0_102 = arith.constant 0 : index
      %c0_103 = arith.constant 0 : index
      %c0_104 = arith.constant 0 : index
      %c0_105 = arith.constant 0 : index
      %70 = vector.load %arg11[%c0_102, %c0_103, %c0_104, %c0_105] : memref<1x2x8x128xf32, #tpu.memory_space<vmem>>, vector<1x2x8x128xf32>
      tpu.vector_store %arg11[%c0_102, %c0_103, %c0_104, %c0_105], %69 {strides = array<i32>} : memref<1x2x8x128xf32, #tpu.memory_space<vmem>>, vector<1x2x8x128xf32>,
      %cst_106 = arith.constant 0.000000e+00 : f32
      %71 = vector.broadcast %cst_106 : f32 to vector<1x2x8x128xf32>
      %c0_107 = arith.constant 0 : index
      %c0_108 = arith.constant 0 : index
      %c0_109 = arith.constant 0 : index
      %c0_110 = arith.constant 0 : index
      %72 = vector.load %arg12[%c0_107, %c0_108, %c0_109, %c0_110] : memref<1x2x8x128xf32, #tpu.memory_space<vmem>>, vector<1x2x8x128xf32>
      tpu.vector_store %arg12[%c0_107, %c0_108, %c0_109, %c0_110], %71 {strides = array<i32>} : memref<1x2x8x128xf32, #tpu.memory_space<vmem>>, vector<1x2x8x128xf32>,
    } else {
    }
    %c0 = arith.constant 0 : index
    %c0_1 = arith.constant 0 : index
    %c0_2 = arith.constant 0 : index
    %c0_3 = arith.constant 0 : index
    %3 = vector.load %arg12[%c0, %c0_1, %c0_2, %c0_3] : memref<1x2x8x128xf32, #tpu.memory_space<vmem>>, vector<1x2x8x128xf32>
    %c0_4 = arith.constant 0 : index
    %c0_5 = arith.constant 0 : index
    %c0_6 = arith.constant 0 : index
    %c0_7 = arith.constant 0 : index
    %4 = vector.load %arg6[%c0_4, %c0_5, %c0_6, %c0_7] : memref<1x2x8x128xf32, #tpu.memory_space<vmem>>, vector<1x2x8x128xf32>
    %c0_8 = arith.constant 0 : index
    %c0_9 = arith.constant 0 : index
    %c0_10 = arith.constant 0 : index
    %c0_11 = arith.constant 0 : index
    %5 = vector.load %arg7[%c0_8, %c0_9, %c0_10, %c0_11] : memref<1x2x8x128xf32, #tpu.memory_space<vmem>>, vector<1x2x8x128xf32>
    %c0_12 = arith.constant 0 : index
    %c0_13 = arith.constant 0 : index
    %c0_14 = arith.constant 0 : index
    %c0_15 = arith.constant 0 : index
    %6 = vector.load %arg8[%c0_12, %c0_13, %c0_14, %c0_15] : memref<1x2x8x128xf32, #tpu.memory_space<vmem>>, vector<1x2x8x128xf32>
    %c0_16 = arith.constant 0 : index
    %c0_17 = arith.constant 0 : index
    %c0_18 = arith.constant 0 : index
    %c0_19 = arith.constant 0 : index
    %7 = vector.load %arg9[%c0_16, %c0_17, %c0_18, %c0_19] : memref<1x2x8x128xf32, #tpu.memory_space<vmem>>, vector<1x2x8x128xf32>
    %c0_20 = arith.constant 0 : index
    %c0_21 = arith.constant 0 : index
    %c0_22 = arith.constant 0 : index
    %c0_23 = arith.constant 0 : index
    %8 = vector.load %arg10[%c0_20, %c0_21, %c0_22, %c0_23] : memref<1x2x8x128xf32, #tpu.memory_space<vmem>>, vector<1x2x8x128xf32>
    %c0_24 = arith.constant 0 : index
    %c0_25 = arith.constant 0 : index
    %c0_26 = arith.constant 0 : index
    %c0_27 = arith.constant 0 : index
    %9 = vector.load %arg11[%c0_24, %c0_25, %c0_26, %c0_27] : memref<1x2x8x128xf32, #tpu.memory_space<vmem>>, vector<1x2x8x128xf32>
    %c0_28 = arith.constant 0 : index
    %c0_29 = arith.constant 0 : index
    %c0_30 = arith.constant 0 : index
    %10 = vector.load %arg5[%c0_28, %c0_29, %c0_30] : memref<2x8x128xf32, #tpu.memory_space<vmem>>, vector<2x8x128xf32>
    %11 = vector.shape_cast %10 : vector<2x8x128xf32> to vector<1x2x8x128xf32>
    %12 = arith.addf %3, %11 : vector<1x2x8x128xf32>
    %c0_31 = arith.constant 0 : index
    %c0_32 = arith.constant 0 : index
    %c0_33 = arith.constant 0 : index
    %13 = vector.load %arg2[%c0_31, %c0_32, %c0_33] : memref<2x8x128xf32, #tpu.memory_space<vmem>>, vector<2x8x128xf32>
    %cst = arith.constant 5.000000e-01 : f32
    %14 = vector.broadcast %cst : f32 to vector<2x8x128xf32>
    %15 = arith.mulf %14, %13 : vector<2x8x128xf32>
    %16 = math.tanh %15 : vector<2x8x128xf32>
    %cst_34 = arith.constant 5.000000e-01 : f32
    %17 = vector.broadcast %cst_34 : f32 to vector<2x8x128xf32>
    %18 = arith.mulf %17, %16 : vector<2x8x128xf32>
    %cst_35 = arith.constant 5.000000e-01 : f32
    %19 = vector.broadcast %cst_35 : f32 to vector<2x8x128xf32>
    %20 = arith.addf %18, %19 : vector<2x8x128xf32>
    %21 = arith.mulf %20, %10 : vector<2x8x128xf32>
    %22 = vector.shape_cast %21 : vector<2x8x128xf32> to vector<1x2x8x128xf32>
    %23 = arith.addf %4, %22 : vector<1x2x8x128xf32>
    %24 = vector.shape_cast %20 : vector<2x8x128xf32> to vector<1x2x8x128xf32>
    %25 = arith.addf %7, %24 : vector<1x2x8x128xf32>
    %c0_36 = arith.constant 0 : index
    %c0_37 = arith.constant 0 : index
    %c0_38 = arith.constant 0 : index
    %26 = vector.load %arg3[%c0_36, %c0_37, %c0_38] : memref<2x8x128xf32, #tpu.memory_space<vmem>>, vector<2x8x128xf32>
    %cst_39 = arith.constant 5.000000e-01 : f32
    %27 = vector.broadcast %cst_39 : f32 to vector<2x8x128xf32>
    %28 = arith.mulf %27, %26 : vector<2x8x128xf32>
    %29 = math.tanh %28 : vector<2x8x128xf32>
    %cst_40 = arith.constant 5.000000e-01 : f32
    %30 = vector.broadcast %cst_40 : f32 to vector<2x8x128xf32>
    %31 = arith.mulf %30, %29 : vector<2x8x128xf32>
    %cst_41 = arith.constant 5.000000e-01 : f32
    %32 = vector.broadcast %cst_41 : f32 to vector<2x8x128xf32>
    %33 = arith.addf %31, %32 : vector<2x8x128xf32>
    %34 = arith.mulf %33, %10 : vector<2x8x128xf32>
    %35 = vector.shape_cast %34 : vector<2x8x128xf32> to vector<1x2x8x128xf32>
    %36 = arith.addf %5, %35 : vector<1x2x8x128xf32>
    %37 = vector.shape_cast %33 : vector<2x8x128xf32> to vector<1x2x8x128xf32>
    %38 = arith.addf %8, %37 : vector<1x2x8x128xf32>
    %c0_42 = arith.constant 0 : index
    %c0_43 = arith.constant 0 : index
    %c0_44 = arith.constant 0 : index
    %39 = vector.load %arg4[%c0_42, %c0_43, %c0_44] : memref<2x8x128xf32, #tpu.memory_space<vmem>>, vector<2x8x128xf32>
    %cst_45 = arith.constant 5.000000e-01 : f32
    %40 = vector.broadcast %cst_45 : f32 to vector<2x8x128xf32>
    %41 = arith.mulf %40, %39 : vector<2x8x128xf32>
    %42 = math.tanh %41 : vector<2x8x128xf32>
    %cst_46 = arith.constant 5.000000e-01 : f32
    %43 = vector.broadcast %cst_46 : f32 to vector<2x8x128xf32>
    %44 = arith.mulf %43, %42 : vector<2x8x128xf32>
    %cst_47 = arith.constant 5.000000e-01 : f32
    %45 = vector.broadcast %cst_47 : f32 to vector<2x8x128xf32>
    %46 = arith.addf %44, %45 : vector<2x8x128xf32>
    %47 = arith.mulf %46, %10 : vector<2x8x128xf32>
    %48 = vector.shape_cast %47 : vector<2x8x128xf32> to vector<1x2x8x128xf32>
    %49 = arith.addf %6, %48 : vector<1x2x8x128xf32>
    %50 = vector.shape_cast %46 : vector<2x8x128xf32> to vector<1x2x8x128xf32>
    %51 = arith.addf %9, %50 : vector<1x2x8x128xf32>
    %c0_48 = arith.constant 0 : index
    %c0_49 = arith.constant 0 : index
    %c0_50 = arith.constant 0 : index
    %c0_51 = arith.constant 0 : index
    %52 = vector.load %arg12[%c0_48, %c0_49, %c0_50, %c0_51] : memref<1x2x8x128xf32, #tpu.memory_space<vmem>>, vector<1x2x8x128xf32>
    tpu.vector_store %arg12[%c0_48, %c0_49, %c0_50, %c0_51], %12 {strides = array<i32>} : memref<1x2x8x128xf32, #tpu.memory_space<vmem>>, vector<1x2x8x128xf32>,
    %c0_52 = arith.constant 0 : index
    %c0_53 = arith.constant 0 : index
    %c0_54 = arith.constant 0 : index
    %c0_55 = arith.constant 0 : index
    %53 = vector.load %arg6[%c0_52, %c0_53, %c0_54, %c0_55] : memref<1x2x8x128xf32, #tpu.memory_space<vmem>>, vector<1x2x8x128xf32>
    tpu.vector_store %arg6[%c0_52, %c0_53, %c0_54, %c0_55], %23 {strides = array<i32>} : memref<1x2x8x128xf32, #tpu.memory_space<vmem>>, vector<1x2x8x128xf32>,
    %c0_56 = arith.constant 0 : index
    %c0_57 = arith.constant 0 : index
    %c0_58 = arith.constant 0 : index
    %c0_59 = arith.constant 0 : index
    %54 = vector.load %arg9[%c0_56, %c0_57, %c0_58, %c0_59] : memref<1x2x8x128xf32, #tpu.memory_space<vmem>>, vector<1x2x8x128xf32>
    tpu.vector_store %arg9[%c0_56, %c0_57, %c0_58, %c0_59], %25 {strides = array<i32>} : memref<1x2x8x128xf32, #tpu.memory_space<vmem>>, vector<1x2x8x128xf32>,
    %c0_60 = arith.constant 0 : index
    %c0_61 = arith.constant 0 : index
    %c0_62 = arith.constant 0 : index
    %c0_63 = arith.constant 0 : index
    %55 = vector.load %arg7[%c0_60, %c0_61, %c0_62, %c0_63] : memref<1x2x8x128xf32, #tpu.memory_space<vmem>>, vector<1x2x8x128xf32>
    tpu.vector_store %arg7[%c0_60, %c0_61, %c0_62, %c0_63], %36 {strides = array<i32>} : memref<1x2x8x128xf32, #tpu.memory_space<vmem>>, vector<1x2x8x128xf32>,
    %c0_64 = arith.constant 0 : index
    %c0_65 = arith.constant 0 : index
    %c0_66 = arith.constant 0 : index
    %c0_67 = arith.constant 0 : index
    %56 = vector.load %arg10[%c0_64, %c0_65, %c0_66, %c0_67] : memref<1x2x8x128xf32, #tpu.memory_space<vmem>>, vector<1x2x8x128xf32>
    tpu.vector_store %arg10[%c0_64, %c0_65, %c0_66, %c0_67], %38 {strides = array<i32>} : memref<1x2x8x128xf32, #tpu.memory_space<vmem>>, vector<1x2x8x128xf32>,
    %c0_68 = arith.constant 0 : index
    %c0_69 = arith.constant 0 : index
    %c0_70 = arith.constant 0 : index
    %c0_71 = arith.constant 0 : index
    %57 = vector.load %arg8[%c0_68, %c0_69, %c0_70, %c0_71] : memref<1x2x8x128xf32, #tpu.memory_space<vmem>>, vector<1x2x8x128xf32>
    tpu.vector_store %arg8[%c0_68, %c0_69, %c0_70, %c0_71], %49 {strides = array<i32>} : memref<1x2x8x128xf32, #tpu.memory_space<vmem>>, vector<1x2x8x128xf32>,
    %c0_72 = arith.constant 0 : index
    %c0_73 = arith.constant 0 : index
    %c0_74 = arith.constant 0 : index
    %c0_75 = arith.constant 0 : index
    %58 = vector.load %arg11[%c0_72, %c0_73, %c0_74, %c0_75] : memref<1x2x8x128xf32, #tpu.memory_space<vmem>>, vector<1x2x8x128xf32>
    tpu.vector_store %arg11[%c0_72, %c0_73, %c0_74, %c0_75], %51 {strides = array<i32>} : memref<1x2x8x128xf32, #tpu.memory_space<vmem>>, vector<1x2x8x128xf32>,
    return
  }
  func.func @transform_0(%arg0: i32, %arg1: i32) -> (i32, i32, i32) {
    %c1_i32 = arith.constant 1 : i32
    %0 = arith.muli %arg0, %c1_i32 : i32
    %1 = arith.addi %0, %arg1 : i32
    %c0_i32 = arith.constant 0 : i32
    %c0_i32_0 = arith.constant 0 : i32
    %c0_i32_1 = arith.constant 0 : i32
    return %c0_i32, %1, %c0_i32_0 : i32, i32, i32
  }
  func.func @transform_1(%arg0: i32, %arg1: i32) -> (i32, i32, i32) {
    %c1_i32 = arith.constant 1 : i32
    %0 = arith.muli %arg0, %c1_i32 : i32
    %1 = arith.addi %0, %arg1 : i32
    %c0_i32 = arith.constant 0 : i32
    %c0_i32_0 = arith.constant 0 : i32
    %c0_i32_1 = arith.constant 0 : i32
    return %c0_i32, %1, %c0_i32_0 : i32, i32, i32
  }
  func.func @transform_2(%arg0: i32, %arg1: i32) -> (i32, i32, i32) {
    %c1_i32 = arith.constant 1 : i32
    %0 = arith.muli %arg0, %c1_i32 : i32
    %1 = arith.addi %0, %arg1 : i32
    %c0_i32 = arith.constant 0 : i32
    %c0_i32_0 = arith.constant 0 : i32
    %c0_i32_1 = arith.constant 0 : i32
    return %c0_i32, %1, %c0_i32_0 : i32, i32, i32
  }
  func.func @transform_3(%arg0: i32, %arg1: i32) -> (i32, i32, i32) {
    %c1_i32 = arith.constant 1 : i32
    %0 = arith.muli %arg0, %c1_i32 : i32
    %1 = arith.addi %0, %arg1 : i32
    %c0_i32 = arith.constant 0 : i32
    %c0_i32_0 = arith.constant 0 : i32
    %c0_i32_1 = arith.constant 0 : i32
    return %c0_i32, %1, %c0_i32_0 : i32, i32, i32
  }
  func.func @transform_4(%arg0: i32, %arg1: i32) -> (i32, i32, i32, i32) {
    %c0_i32 = arith.constant 0 : i32
    %c0_i32_0 = arith.constant 0 : i32
    %c0_i32_1 = arith.constant 0 : i32
    %c0_i32_2 = arith.constant 0 : i32
    return %arg0, %c0_i32, %c0_i32_0, %c0_i32_1 : i32, i32, i32, i32
  }
  func.func @transform_5(%arg0: i32, %arg1: i32) -> (i32, i32, i32, i32) {
    %c0_i32 = arith.constant 0 : i32
    %c0_i32_0 = arith.constant 0 : i32
    %c0_i32_1 = arith.constant 0 : i32
    %c0_i32_2 = arith.constant 0 : i32
    return %arg0, %c0_i32, %c0_i32_0, %c0_i32_1 : i32, i32, i32, i32
  }
  func.func @transform_6(%arg0: i32, %arg1: i32) -> (i32, i32, i32, i32) {
    %c0_i32 = arith.constant 0 : i32
    %c0_i32_0 = arith.constant 0 : i32
    %c0_i32_1 = arith.constant 0 : i32
    %c0_i32_2 = arith.constant 0 : i32
    return %arg0, %c0_i32, %c0_i32_0, %c0_i32_1 : i32, i32, i32, i32
  }
  func.func @transform_7(%arg0: i32, %arg1: i32) -> (i32, i32, i32, i32) {
    %c0_i32 = arith.constant 0 : i32
    %c0_i32_0 = arith.constant 0 : i32
    %c0_i32_1 = arith.constant 0 : i32
    %c0_i32_2 = arith.constant 0 : i32
    return %arg0, %c0_i32, %c0_i32_0, %c0_i32_1 : i32, i32, i32, i32
  }
  func.func @transform_8(%arg0: i32, %arg1: i32) -> (i32, i32, i32, i32) {
    %c0_i32 = arith.constant 0 : i32
    %c0_i32_0 = arith.constant 0 : i32
    %c0_i32_1 = arith.constant 0 : i32
    %c0_i32_2 = arith.constant 0 : i32
    return %arg0, %c0_i32, %c0_i32_0, %c0_i32_1 : i32, i32, i32, i32
  }
  func.func @transform_9(%arg0: i32, %arg1: i32) -> (i32, i32, i32, i32) {
    %c0_i32 = arith.constant 0 : i32
    %c0_i32_0 = arith.constant 0 : i32
    %c0_i32_1 = arith.constant 0 : i32
    %c0_i32_2 = arith.constant 0 : i32
    return %arg0, %c0_i32, %c0_i32_0, %c0_i32_1 : i32, i32, i32, i32
  }
  func.func @transform_10(%arg0: i32, %arg1: i32) -> (i32, i32, i32, i32) {
    %c0_i32 = arith.constant 0 : i32
    %c0_i32_0 = arith.constant 0 : i32
    %c0_i32_1 = arith.constant 0 : i32
    %c0_i32_2 = arith.constant 0 : i32
    return %arg0, %c0_i32, %c0_i32_0, %c0_i32_1 : i32, i32, i32, i32
  }
}

</mosaic_0001>

<llo_original>
// kernel: dice_loss_forward.1
$region0: #{dice_loss_forward.1}
  #allocation0 [shape = 'u32[]', space=smem, size = 0x4, offset = 0x4, fixed_abs, tag = 'smem constant byte address 0x4 - core index']
  #allocation1 [shape = 'u32[144,128]{1,0:T(1,128)}', space=vmem, size = 0x12000, scoped, tag = 'internal scratch']
  %s0 = inlined_call_operand.vmem [shape: f32[2,8,128], index: 0, kind: input, shape index: {}]
  %s1 = inlined_call_operand.vmem [shape: f32[2,8,128], index: 1, kind: input, shape index: {}]
  %s2 = inlined_call_operand.vmem [shape: f32[2,8,128], index: 2, kind: input, shape index: {}]
  %s3 = inlined_call_operand.vmem [shape: f32[2,8,128], index: 3, kind: input, shape index: {}]
  %s4 = inlined_call_operand.vmem [shape: f32[1,2,8,128], index: 4, kind: output, shape index: {0}]
  %s5 = inlined_call_operand.vmem [shape: f32[1,2,8,128], index: 5, kind: output, shape index: {1}]
  %s6 = inlined_call_operand.vmem [shape: f32[1,2,8,128], index: 6, kind: output, shape index: {2}]
  %s7 = inlined_call_operand.vmem [shape: f32[1,2,8,128], index: 7, kind: output, shape index: {3}]
  %s8 = inlined_call_operand.vmem [shape: f32[1,2,8,128], index: 8, kind: output, shape index: {4}]
  %s9 = inlined_call_operand.vmem [shape: f32[1,2,8,128], index: 9, kind: output, shape index: {5}]
  %s10 = inlined_call_operand.vmem [shape: f32[1,2,8,128], index: 10, kind: output, shape index: {6}]
  %11 = xla_tuple %s4, %s5, %s6, %s7, %s8, %s9, %s10
  %s12 = sld [smem:[#allocation0]]
  $region78: #{dice_loss_forward.1} parent=0
    _
  %s14 = ssub.s32 1, %s12
  %s15 = scalar_select 0, %s14, %s12
  // Predicated region
  $region2: #{dice_loss_forward.1} parent=0 // pred_check
    _
  $region3: #{dice_loss_forward.1} parent=0 // pred_check_branch
    %17 = sbr.rel (0) target = $region5
  $region4: #{dice_loss_forward.1} parent=0 // pred_region
    %s18 = sadd.s32 0, 0
    %p19 = scmp.lt.s32.totalorder %s18, 0
    %s20 = scalar_select %p19, %s18, 0
    %s21 = smul.addr %s20, 8
    %s22 = scalar_lea.vmem %s0, %s21
    %s23 = sadd.s32 0, 0
  $region5: #{dice_loss_forward.1} parent=0 // pred_fallthru
    _
  // Predicated region
  $region6: #{dice_loss_forward.1} parent=0 // pred_check
    _
  $region7: #{dice_loss_forward.1} parent=0 // pred_check_branch
    %25 = sbr.rel (0) target = $region9
  $region8: #{dice_loss_forward.1} parent=0 // pred_region
    %s26 = sadd.s32 0, 0
    %p27 = scmp.lt.s32.totalorder %s26, 0
    %s28 = scalar_select %p27, %s26, 0
    %s29 = smul.addr %s28, 8
    %s30 = scalar_lea.vmem %s1, %s29
    %s31 = sadd.s32 0, 0
  $region9: #{dice_loss_forward.1} parent=0 // pred_fallthru
    _
  // Predicated region
  $region10: #{dice_loss_forward.1} parent=0 // pred_check
    _
  $region11: #{dice_loss_forward.1} parent=0 // pred_check_branch
    %33 = sbr.rel (0) target = $region13
  $region12: #{dice_loss_forward.1} parent=0 // pred_region
    %s34 = sadd.s32 0, 0
    %p35 = scmp.lt.s32.totalorder %s34, 0
    %s36 = scalar_select %p35, %s34, 0
    %s37 = smul.addr %s36, 8
    %s38 = scalar_lea.vmem %s2, %s37
    %s39 = sadd.s32 0, 0
  $region13: #{dice_loss_forward.1} parent=0 // pred_fallthru
    _
  // Predicated region
  $region14: #{dice_loss_forward.1} parent=0 // pred_check
    _
  $region15: #{dice_loss_forward.1} parent=0 // pred_check_branch
    %41 = sbr.rel (0) target = $region17
  $region16: #{dice_loss_forward.1} parent=0 // pred_region
    %s42 = sadd.s32 0, 0
    %p43 = scmp.lt.s32.totalorder %s42, 0
    %s44 = scalar_select %p43, %s42, 0
    %s45 = smul.addr %s44, 8
    %s46 = scalar_lea.vmem %s3, %s45
    %s47 = sadd.s32 0, 0
  $region17: #{dice_loss_forward.1} parent=0 // pred_fallthru
    _
  %s48 = sadd.s32 0, 0
  %p49 = scmp.lt.s32.totalorder %s48, 0
  %s50 = scalar_select %p49, %s48, 0
  %s51 = smul.addr %s50, 8
  %s52 = scalar_lea.vmem %s0, %s51
  %s53 = sadd.s32 0, 0
  %p54 = scmp.lt.s32.totalorder %s53, 0
  %s55 = scalar_select %p54, %s53, 0
  %s56 = smul.addr %s55, 8
  %s57 = scalar_lea.vmem %s1, %s56
  %s58 = sadd.s32 0, 0
  %p59 = scmp.lt.s32.totalorder %s58, 0
  %s60 = scalar_select %p59, %s58, 0
  %s61 = smul.addr %s60, 8
  %s62 = scalar_lea.vmem %s2, %s61
  %s63 = sadd.s32 0, 0
  %p64 = scmp.lt.s32.totalorder %s63, 0
  %s65 = scalar_select %p64, %s63, 0
  %s66 = smul.addr %s65, 8
  %s67 = scalar_lea.vmem %s3, %s66
  %s68 = sadd.s32 0, 0
  %p69 = scmp.lt.s32.totalorder %s68, 0
  %s70 = scalar_select %p69, %s68, 0
  %s71 = smul.addr %s70, 8
  %s72 = scalar_lea.vmem %s0, %s71
  %s73 = sadd.s32 0, 0
  %s74 = sadd.s32 0, 0
  %p75 = scmp.lt.s32.totalorder %s74, 0
  %s76 = scalar_select %p75, %s74, 0
  %s77 = smul.addr %s76, 8
  %s78 = scalar_lea.vmem %s1, %s77
  %s79 = sadd.s32 0, 0
  %s80 = sadd.s32 0, 0
  %p81 = scmp.lt.s32.totalorder %s80, 0
  %s82 = scalar_select %p81, %s80, 0
  %s83 = smul.addr %s82, 8
  %s84 = scalar_lea.vmem %s2, %s83
  %s85 = sadd.s32 0, 0
  %s86 = sadd.s32 0, 0
  %p87 = scmp.lt.s32.totalorder %s86, 0
  %s88 = scalar_select %p87, %s86, 0
  %s89 = smul.addr %s88, 8
  %s90 = scalar_lea.vmem %s3, %s89
  %s91 = sadd.s32 0, 0
  %p92 = scmp.eq.s32.totalorder 0, 0
  // Predicated region
  $region18: #{dice_loss_forward.1} parent=0 // pred_check
    %p93 = pneg %p92
  $region19: #{dice_loss_forward.1} parent=0 // pred_check_branch
    %95 = sbr.rel (%p93) target = $region21
  $region20: #{dice_loss_forward.1} parent=0 // pred_region
    %96 = vst [vmem:[%s4] sm:$0xff] 0.0
    %97 = vst [vmem:[%s4 + $0x8] sm:$0xff] 0.0
    %98 = vst [vmem:[%s5] sm:$0xff] 0.0
    %99 = vst [vmem:[%s5 + $0x8] sm:$0xff] 0.0
    %100 = vst [vmem:[%s6] sm:$0xff] 0.0
    %101 = vst [vmem:[%s6 + $0x8] sm:$0xff] 0.0
    %102 = vst [vmem:[%s7] sm:$0xff] 0.0
    %103 = vst [vmem:[%s7 + $0x8] sm:$0xff] 0.0
    %104 = vst [vmem:[%s8] sm:$0xff] 0.0
    %105 = vst [vmem:[%s8 + $0x8] sm:$0xff] 0.0
    %106 = vst [vmem:[%s9] sm:$0xff] 0.0
    %107 = vst [vmem:[%s9 + $0x8] sm:$0xff] 0.0
    %108 = vst [vmem:[%s10] sm:$0xff] 0.0
    %109 = vst [vmem:[%s10 + $0x8] sm:$0xff] 0.0
  $region21: #{dice_loss_forward.1} parent=0 // pred_fallthru
    _
  %v110 = vld [vmem:[%s10] sm:$0xff]
  %v111 = vld [vmem:[%s10 + $0x8] sm:$0xff]
  %v112 = vld [vmem:[%s4] sm:$0xff]
  %v113 = vld [vmem:[%s4 + $0x8] sm:$0xff]
  %v114 = vld [vmem:[%s5] sm:$0xff]
  %v115 = vld [vmem:[%s5 + $0x8] sm:$0xff]
  %v116 = vld [vmem:[%s6] sm:$0xff]
  %v117 = vld [vmem:[%s6 + $0x8] sm:$0xff]
  %v118 = vld [vmem:[%s7] sm:$0xff]
  %v119 = vld [vmem:[%s7 + $0x8] sm:$0xff]
  %v120 = vld [vmem:[%s8] sm:$0xff]
  %v121 = vld [vmem:[%s8 + $0x8] sm:$0xff]
  %v122 = vld [vmem:[%s9] sm:$0xff]
  %v123 = vld [vmem:[%s9 + $0x8] sm:$0xff]
  %v124 = vld [vmem:[%s90] sm:$0xff]
  %v125 = vld [vmem:[%s90 + $0x8] sm:$0xff]
  %v126 = vadd.f32 %v110, %v124
  %v127 = vadd.f32 %v111, %v125
  %v128 = vld [vmem:[%s72] sm:$0xff]
  %v129 = vld [vmem:[%s72 + $0x8] sm:$0xff]
  %v130 = vmul.f32 %v128, 0.5
  %v131 = vmul.f32 %v129, 0.5
  %v132 = vtanh.pop %v130
  %v133 = vtanh.pop %v131
  %v134 = vmul.f32 %v132, 0.5
  %v135 = vmul.f32 %v133, 0.5
  %v136 = vadd.f32 %v134, 0.5
  %v137 = vadd.f32 %v135, 0.5
  %v138 = vmul.f32 %v136, %v124
  %v139 = vmul.f32 %v137, %v125
  %v140 = vadd.f32 %v112, %v138
  %v141 = vadd.f32 %v113, %v139
  %v142 = vadd.f32 %v118, %v136
  %v143 = vadd.f32 %v119, %v137
  %v144 = vld [vmem:[%s78] sm:$0xff]
  %v145 = vld [vmem:[%s78 + $0x8] sm:$0xff]
  %v146 = vmul.f32 %v144, 0.5
  %v147 = vmul.f32 %v145, 0.5
  %v148 = vtanh.pop %v146
  %v149 = vtanh.pop %v147
  %v150 = vmul.f32 %v148, 0.5
  %v151 = vmul.f32 %v149, 0.5
  %v152 = vadd.f32 %v150, 0.5
  %v153 = vadd.f32 %v151, 0.5
  %v154 = vmul.f32 %v152, %v124
  %v155 = vmul.f32 %v153, %v125
  %v156 = vadd.f32 %v114, %v154
  %v157 = vadd.f32 %v115, %v155
  %v158 = vadd.f32 %v120, %v152
  %v159 = vadd.f32 %v121, %v153
  %v160 = vld [vmem:[%s84] sm:$0xff]
  %v161 = vld [vmem:[%s84 + $0x8] sm:$0xff]
  %v162 = vmul.f32 %v160, 0.5
  %v163 = vmul.f32 %v161, 0.5
  %v164 = vtanh.pop %v162
  %v165 = vtanh.pop %v163
  %v166 = vmul.f32 %v164, 0.5
  %v167 = vmul.f32 %v165, 0.5
  %v168 = vadd.f32 %v166, 0.5
  %v169 = vadd.f32 %v167, 0.5
  %v170 = vmul.f32 %v168, %v124
  %v171 = vmul.f32 %v169, %v125
  %v172 = vadd.f32 %v116, %v170
  %v173 = vadd.f32 %v117, %v171
  %v174 = vadd.f32 %v122, %v168
  %v175 = vadd.f32 %v123, %v169
  %176 = vst [vmem:[%s10] sm:$0xff] %v126
  %177 = vst [vmem:[%s10 + $0x8] sm:$0xff] %v127
  %178 = vst [vmem:[%s4] sm:$0xff] %v140
  %179 = vst [vmem:[%s4 + $0x8] sm:$0xff] %v141
  %180 = vst [vmem:[%s7] sm:$0xff] %v142
  %181 = vst [vmem:[%s7 + $0x8] sm:$0xff] %v143
  %182 = vst [vmem:[%s5] sm:$0xff] %v156
  %183 = vst [vmem:[%s5 + $0x8] sm:$0xff] %v157
  %184 = vst [vmem:[%s8] sm:$0xff] %v158
  %185 = vst [vmem:[%s8 + $0x8] sm:$0xff] %v159
  %186 = vst [vmem:[%s6] sm:$0xff] %v172
  %187 = vst [vmem:[%s6 + $0x8] sm:$0xff] %v173
  %188 = vst [vmem:[%s9] sm:$0xff] %v174
  %189 = vst [vmem:[%s9 + $0x8] sm:$0xff] %v175
  // Predicated region
  $region22: #{dice_loss_forward.1} parent=0 // pred_check
    _
  $region23: #{dice_loss_forward.1} parent=0 // pred_check_branch
    %191 = sbr.rel (0) target = $region25
  $region24: #{dice_loss_forward.1} parent=0 // pred_region
    _
  $region25: #{dice_loss_forward.1} parent=0 // pred_fallthru
    _
  // Predicated region
  $region26: #{dice_loss_forward.1} parent=0 // pred_check
    _
  $region27: #{dice_loss_forward.1} parent=0 // pred_check_branch
    %193 = sbr.rel (0) target = $region29
  $region28: #{dice_loss_forward.1} parent=0 // pred_region
    _
  $region29: #{dice_loss_forward.1} parent=0 // pred_fallthru
    _
  // Predicated region
  $region30: #{dice_loss_forward.1} parent=0 // pred_check
    _
  $region31: #{dice_loss_forward.1} parent=0 // pred_check_branch
    %195 = sbr.rel (0) target = $region33
  $region32: #{dice_loss_forward.1} parent=0 // pred_region
    _
  $region33: #{dice_loss_forward.1} parent=0 // pred_fallthru
    _
  // Predicated region
  $region34: #{dice_loss_forward.1} parent=0 // pred_check
    _
  $region35: #{dice_loss_forward.1} parent=0 // pred_check_branch
    %197 = sbr.rel (0) target = $region37
  $region36: #{dice_loss_forward.1} parent=0 // pred_region
    _
  $region37: #{dice_loss_forward.1} parent=0 // pred_fallthru
    _
  // Predicated region
  $region38: #{dice_loss_forward.1} parent=0 // pred_check
    _
  $region39: #{dice_loss_forward.1} parent=0 // pred_check_branch
    %199 = sbr.rel (0) target = $region41
  $region40: #{dice_loss_forward.1} parent=0 // pred_region
    _
  $region41: #{dice_loss_forward.1} parent=0 // pred_fallthru
    _
  // Predicated region
  $region42: #{dice_loss_forward.1} parent=0 // pred_check
    _
  $region43: #{dice_loss_forward.1} parent=0 // pred_check_branch
    %201 = sbr.rel (0) target = $region45
  $region44: #{dice_loss_forward.1} parent=0 // pred_region
    _
  $region45: #{dice_loss_forward.1} parent=0 // pred_fallthru
    _
  // Predicated region
  $region46: #{dice_loss_forward.1} parent=0 // pred_check
    _
  $region47: #{dice_loss_forward.1} parent=0 // pred_check_branch
    %203 = sbr.rel (0) target = $region49
  $region48: #{dice_loss_forward.1} parent=0 // pred_region
    _
  $region49: #{dice_loss_forward.1} parent=0 // pred_fallthru
    _
  // Predicated region
  $region50: #{dice_loss_forward.1} parent=0 // pred_check
    _
  $region51: #{dice_loss_forward.1} parent=0 // pred_check_branch
    %205 = sbr.rel (0) target = $region53
  $region52: #{dice_loss_forward.1} parent=0 // pred_region
    _
  $region53: #{dice_loss_forward.1} parent=0 // pred_fallthru
    _
  // Predicated region
  $region54: #{dice_loss_forward.1} parent=0 // pred_check
    _
  $region55: #{dice_loss_forward.1} parent=0 // pred_check_branch
    %207 = sbr.rel (0) target = $region57
  $region56: #{dice_loss_forward.1} parent=0 // pred_region
    _
  $region57: #{dice_loss_forward.1} parent=0 // pred_fallthru
    _
  // Predicated region
  $region58: #{dice_loss_forward.1} parent=0 // pred_check
    _
  $region59: #{dice_loss_forward.1} parent=0 // pred_check_branch
    %209 = sbr.rel (0) target = $region61
  $region60: #{dice_loss_forward.1} parent=0 // pred_region
    _
  $region61: #{dice_loss_forward.1} parent=0 // pred_fallthru
    _
  // Predicated region
  $region62: #{dice_loss_forward.1} parent=0 // pred_check
    _
  $region63: #{dice_loss_forward.1} parent=0 // pred_check_branch
    %211 = sbr.rel (0) target = $region65
  $region64: #{dice_loss_forward.1} parent=0 // pred_region
    _
  $region65: #{dice_loss_forward.1} parent=0 // pred_fallthru
    _
  // Predicated region
  $region66: #{dice_loss_forward.1} parent=0 // pred_check
    _
  $region67: #{dice_loss_forward.1} parent=0 // pred_check_branch
    %213 = sbr.rel (0) target = $region69
  $region68: #{dice_loss_forward.1} parent=0 // pred_region
    _
  $region69: #{dice_loss_forward.1} parent=0 // pred_fallthru
    _
  // Predicated region
  $region70: #{dice_loss_forward.1} parent=0 // pred_check
    _
  $region71: #{dice_loss_forward.1} parent=0 // pred_check_branch
    %215 = sbr.rel (0) target = $region73
  $region72: #{dice_loss_forward.1} parent=0 // pred_region
    _
  $region73: #{dice_loss_forward.1} parent=0 // pred_fallthru
    _
  // Predicated region
  $region74: #{dice_loss_forward.1} parent=0 // pred_check
    _
  $region75: #{dice_loss_forward.1} parent=0 // pred_check_branch
    %217 = sbr.rel (0) target = $region77
  $region76: #{dice_loss_forward.1} parent=0 // pred_region
    _
  $region77: #{dice_loss_forward.1} parent=0 // pred_fallthru
    _

</llo_original>
